<compile_context>
chip_gen: v6e
topology: v6e:2x2x1
jax: 0.10.0
libtpu: 0.0.40
codegen_flags: <defaults>
</compile_context>

<pallas_src>
from functools import partial

import jax
import jax.numpy as jnp
from jax.experimental import pallas as pl
from jax.experimental.pallas import tpu as pltpu

# ---- static scatter pattern from the PyTorch module ------------------------
X_PUT_IDX = (10, 2)                    # x[10] <- y[0], x[2] <- y[1]  (accumulate=False)
X_SET_IDX = 1                          # x[1]  <- 45.0
X_SET_VAL = 45.0
Z_PUT_IDX = ((1, 3), (0, 2), (0, 1))   # z[a, b] += w[k]              (accumulate=True)
# TODO(synk): x[torch.tensor([], dtype=int64)] = 233.0 is an empty scatter -> intentional no-op.


def _x_write_plan():
    """Static row->source plan for x, grouped into contiguous row runs.

    Source is ("y", k) or ("const", value).  Later writes win, matching the
    module's op order (index_put first, then x[1] = 45).  Rows are distinct,
    so order within the kernel does not matter.
    """
    writes = {}
    for k, r in enumerate(X_PUT_IDX):
        writes[r] = ("y", k)
    writes[X_SET_IDX] = ("const", X_SET_VAL)
    rows = sorted(writes)
    runs, cur = [], [rows[0]]
    for r in rows[1:]:
        if r == cur[-1] + 1:
            cur.append(r)
        else:
            runs.append(cur)
            cur = [r]
    runs.append(cur)
    return writes, runs


def _z_write_plan(ncols):
    """Static flattened-row plan for z (rows of the (d0*d1, D) view), grouped
    into contiguous runs.  Reading the accumulate sources straight from the
    original z is valid only because the static (a, b) pairs are duplicate-free.
    """
    rows = sorted((a * ncols + b, k) for k, (a, b) in enumerate(Z_PUT_IDX))
    runs, cur = [], [rows[0]]
    for p in rows[1:]:
        if p[0] == cur[-1][0] + 1:
            cur.append(p)
        else:
            runs.append(cur)
            cur = [p]
    runs.append(cur)
    return runs


X_WRITES, X_RUNS = _x_write_plan()


def index_put_kernel(x_hbm, y_ref, z_hbm, w_ref, xo_hbm, zo_hbm,
                     xrows, zrows, sem, *, z_runs):
    # x aliases xo in HBM: untouched rows are already correct in place.
    del x_hbm
    D = xrows.shape[1]
    sem_i = 0
    pending = []

    # ---- z branch (accumulate=True): start reads of the touched z rows -----
    z_reads = []
    off = 0
    for run in z_runs:
        r0, n = run[0][0], len(run)
        cp = pltpu.make_async_copy(z_hbm.at[r0:r0 + n, :],
                                   zrows.at[off:off + n, :], sem.at[sem_i])
        cp.start()
        z_reads.append(cp)
        sem_i += 1
        off += n

    # ---- x branch: stage touched rows in VMEM, one DMA per contiguous run --
    slot_of = {}
    slot = 0
    for run in X_RUNS:
        for r in run:
            src = X_WRITES[r]
            if src[0] == "const":
                xrows[slot:slot + 1, :] = jnp.full((1, D), src[1], dtype=xrows.dtype)
            else:  # ("y", k)
                k = src[1]
                xrows[slot:slot + 1, :] = y_ref[k:k + 1, :]
            slot_of[r] = slot
            slot += 1
    for run in X_RUNS:
        r0, n = run[0], len(run)
        s0 = slot_of[r0]
        cp = pltpu.make_async_copy(xrows.at[s0:s0 + n, :],
                                   xo_hbm.at[r0:r0 + n, :], sem.at[sem_i])
        cp.start()
        pending.append(cp)
        sem_i += 1

    # ---- z adds + merged write-back -----------------------------------------
    for cp in z_reads:
        cp.wait()
    off = 0
    for run in z_runs:
        for (_r, k) in run:
            zrows[off:off + 1, :] = zrows[off:off + 1, :] + w_ref[k:k + 1, :]
            off += 1
    off = 0
    for run in z_runs:
        r0, n = run[0][0], len(run)
        cp = pltpu.make_async_copy(zrows.at[off:off + n, :],
                                   zo_hbm.at[r0:r0 + n, :], sem.at[sem_i])
        cp.start()
        pending.append(cp)
        sem_i += 1
        off += n

    for cp in pending:
        cp.wait()


def _model_forward_impl(x, y, z, w):
    d0, d1, D = z.shape
    z2 = z.reshape(d0 * d1, D)              # one flat row axis; free on host side
    z_runs = _z_write_plan(d1)

    n_xrows = sum(len(r) for r in X_RUNS)
    n_zrows = sum(len(r) for r in z_runs)
    n_sems = len(X_RUNS) + 2 * len(z_runs)

    any_spec = pl.BlockSpec(memory_space=pl.ANY)
    vmem_spec = pl.BlockSpec(memory_space=pltpu.MemorySpace.VMEM)

    x_out, z2_out = pl.pallas_call(
        partial(index_put_kernel, z_runs=z_runs),
        out_shape=(
            jax.ShapeDtypeStruct(x.shape, x.dtype),
            jax.ShapeDtypeStruct(z2.shape, z2.dtype),
        ),
        in_specs=[any_spec, vmem_spec, any_spec, vmem_spec],
        out_specs=(any_spec, any_spec),
        # x (arg 0) aliases x_out (out 0); z (arg 2) aliases z_out (out 1),
        # so only the touched rows need to be written.
        input_output_aliases={0: 0, 2: 1},
        scratch_shapes=[
            pltpu.VMEM((n_xrows, x.shape[1]), x.dtype),
            pltpu.VMEM((n_zrows, D), z.dtype),
            pltpu.SemaphoreType.DMA((n_sems,)),
        ],
    )(x, y, z2, w)
    return x_out, z2_out.reshape(z.shape)


# Donate x and z so the HBM aliasing actually reuses their buffers.
model_forward = jax.jit(_model_forward_impl, donate_argnums=(0, 2))


def model_forward_ref(x, y, z, w):
    """Pure-JAX reference mirroring the PyTorch semantics."""
    x_out = x.at[jnp.array(X_PUT_IDX)].set(y)
    za = jnp.array([p[0] for p in Z_PUT_IDX])
    zb = jnp.array([p[1] for p in Z_PUT_IDX])
    z_out = z.at[za, zb].add(w)
    x_out = x_out.at[X_SET_IDX].set(jnp.asarray(X_SET_VAL, x.dtype))
    # empty-index assignment of 233.0 is a no-op
    return x_out, z_out


if __name__ == "__main__":
    key = jax.random.PRNGKey(0)
    k1, k2, k3, k4 = jax.random.split(key, 4)

    D = 128  # lane-dense last dim: unmasked full-lane row stores / aligned DMAs
    x = jax.random.normal(k1, (12, D), dtype=jnp.float32)    # dim0 >= 11 (index 10)
    y = jax.random.normal(k2, (2, D), dtype=jnp.float32)
    z = jax.random.normal(k3, (2, 4, D), dtype=jnp.float32)  # dims >= (2, 4)
    w = jax.random.normal(k4, (3, D), dtype=jnp.float32)

    # Compute the pure-JAX reference BEFORE running the kernel (x, z are donated).
    x_exp, z_exp = jax.block_until_ready(model_forward_ref(x, y, z, w))

    x_out, z_out = jax.block_until_ready(model_forward(x, y, z, w))

    assert x_out.shape == x_exp.shape and z_out.shape == z_exp.shape
    assert jnp.allclose(x_out, x_exp, atol=1e-6), "x mismatch"
    assert jnp.allclose(z_out, z_exp, atol=1e-6), "z mismatch"
    print("KERNEL_OK")
</pallas_src>

<mosaic_0001>
module attributes {stable_mosaic.version = 11 : i64} {
  func.func @index_put_kernel(%arg0: memref<12x128xf32, #tpu.memory_space<any>>, %arg1: memref<2x128xf32, #tpu.memory_space<vmem>>, %arg2: memref<8x128xf32, #tpu.memory_space<any>>, %arg3: memref<3x128xf32, #tpu.memory_space<vmem>>, %arg4: memref<12x128xf32, #tpu.memory_space<any>>, %arg5: memref<8x128xf32, #tpu.memory_space<any>>, %arg6: memref<3x128xf32, #tpu.memory_space<vmem>>, %arg7: memref<3x128xf32, #tpu.memory_space<vmem>>, %arg8: memref<6x!tpu.dma_semaphore, #tpu.memory_space<semaphore_mem>>) attributes {dimension_semantics = [], scalar_prefetch = 0 : i64, scratch_operands = 3 : i64, tpu.core_type = #tpu.core_type<tc>} {
    %c0_i32 = arith.constant 0 : i32
    %c1_i32 = arith.constant 1 : i32
    %c0_i32_0 = arith.constant 0 : i32
    %0 = tpu.memref_slice %arg2[%c1_i32, %c0_i32_0] : memref<8x128xf32, #tpu.memory_space<any>> -> memref<2x128xf32, #tpu.memory_space<any>>
    %c0_i32_1 = arith.constant 0 : i32
    %c0_i32_2 = arith.constant 0 : i32
    %1 = tpu.memref_slice %arg7[%c0_i32_1, %c0_i32_2] : memref<3x128xf32, #tpu.memory_space<vmem>> -> memref<2x128xf32, #tpu.memory_space<vmem>>
    %2 = tpu.memref_slice %arg8[%c0_i32] : memref<6x!tpu.dma_semaphore, #tpu.memory_space<semaphore_mem>> -> memref<1x!tpu.dma_semaphore, #tpu.memory_space<semaphore_mem>>
    %3 = tpu.memref_squeeze %2 : memref<1x!tpu.dma_semaphore, #tpu.memory_space<semaphore_mem>> -> memref<!tpu.dma_semaphore, #tpu.memory_space<semaphore_mem>>
    tpu.enqueue_dma source(%0 : memref<2x128xf32, #tpu.memory_space<any>>) target(%1 : memref<2x128xf32, #tpu.memory_space<vmem>>) target_semaphore(%3 : memref<!tpu.dma_semaphore, #tpu.memory_space<semaphore_mem>>)
    %c1_i32_3 = arith.constant 1 : i32
    %c7_i32 = arith.constant 7 : i32
    %c0_i32_4 = arith.constant 0 : i32
    %4 = tpu.memref_slice %arg2[%c7_i32, %c0_i32_4] : memref<8x128xf32, #tpu.memory_space<any>> -> memref<1x128xf32, #tpu.memory_space<any>>
    %c2_i32 = arith.constant 2 : i32
    %c0_i32_5 = arith.constant 0 : i32
    %5 = tpu.memref_slice %arg7[%c2_i32, %c0_i32_5] : memref<3x128xf32, #tpu.memory_space<vmem>> -> memref<1x128xf32, #tpu.memory_space<vmem>>
    %6 = tpu.memref_slice %arg8[%c1_i32_3] : memref<6x!tpu.dma_semaphore, #tpu.memory_space<semaphore_mem>> -> memref<1x!tpu.dma_semaphore, #tpu.memory_space<semaphore_mem>>
    %7 = tpu.memref_squeeze %6 : memref<1x!tpu.dma_semaphore, #tpu.memory_space<semaphore_mem>> -> memref<!tpu.dma_semaphore, #tpu.memory_space<semaphore_mem>>
    tpu.enqueue_dma source(%4 : memref<1x128xf32, #tpu.memory_space<any>>) target(%5 : memref<1x128xf32, #tpu.memory_space<vmem>>) target_semaphore(%7 : memref<!tpu.dma_semaphore, #tpu.memory_space<semaphore_mem>>)
    %cst = arith.constant 4.500000e+01 : f32
    %8 = vector.broadcast %cst : f32 to vector<1x128xf32>
    %c0 = arith.constant 0 : index
    %c0_6 = arith.constant 0 : index
    %9 = vector.load %arg6[%c0, %c0_6] : memref<3x128xf32, #tpu.memory_space<vmem>>, vector<1x128xf32>
    tpu.vector_store %arg6[%c0, %c0_6], %8 {strides = array<i32>} : memref<3x128xf32, #tpu.memory_space<vmem>>, vector<1x128xf32>,
    %c1 = arith.constant 1 : index
    %c0_7 = arith.constant 0 : index
    %10 = vector.load %arg1[%c1, %c0_7] : memref<2x128xf32, #tpu.memory_space<vmem>>, vector<1x128xf32>
    %c1_8 = arith.constant 1 : index
    %c0_9 = arith.constant 0 : index
    %11 = vector.load %arg6[%c1_8, %c0_9] : memref<3x128xf32, #tpu.memory_space<vmem>>, vector<1x128xf32>
    tpu.vector_store %arg6[%c1_8, %c0_9], %10 {strides = array<i32>} : memref<3x128xf32, #tpu.memory_space<vmem>>, vector<1x128xf32>,
    %c0_10 = arith.constant 0 : index
    %c0_11 = arith.constant 0 : index
    %12 = vector.load %arg1[%c0_10, %c0_11] : memref<2x128xf32, #tpu.memory_space<vmem>>, vector<1x128xf32>
    %c2 = arith.constant 2 : index
    %c0_12 = arith.constant 0 : index
    %13 = vector.load %arg6[%c2, %c0_12] : memref<3x128xf32, #tpu.memory_space<vmem>>, vector<1x128xf32>
    tpu.vector_store %arg6[%c2, %c0_12], %12 {strides = array<i32>} : memref<3x128xf32, #tpu.memory_space<vmem>>, vector<1x128xf32>,
    %c2_i32_13 = arith.constant 2 : i32
    %c0_i32_14 = arith.constant 0 : i32
    %c0_i32_15 = arith.constant 0 : i32
    %14 = tpu.memref_slice %arg6[%c0_i32_14, %c0_i32_15] : memref<3x128xf32, #tpu.memory_space<vmem>> -> memref<2x128xf32, #tpu.memory_space<vmem>>
    %c1_i32_16 = arith.constant 1 : i32
    %c0_i32_17 = arith.constant 0 : i32
    %15 = tpu.memref_slice %arg4[%c1_i32_16, %c0_i32_17] : memref<12x128xf32, #tpu.memory_space<any>> -> memref<2x128xf32, #tpu.memory_space<any>>
    %16 = tpu.memref_slice %arg8[%c2_i32_13] : memref<6x!tpu.dma_semaphore, #tpu.memory_space<semaphore_mem>> -> memref<1x!tpu.dma_semaphore, #tpu.memory_space<semaphore_mem>>
    %17 = tpu.memref_squeeze %16 : memref<1x!tpu.dma_semaphore, #tpu.memory_space<semaphore_mem>> -> memref<!tpu.dma_semaphore, #tpu.memory_space<semaphore_mem>>
    tpu.enqueue_dma source(%14 : memref<2x128xf32, #tpu.memory_space<vmem>>) target(%15 : memref<2x128xf32, #tpu.memory_space<any>>) target_semaphore(%17 : memref<!tpu.dma_semaphore, #tpu.memory_space<semaphore_mem>>)
    %c3_i32 = arith.constant 3 : i32
    %c2_i32_18 = arith.constant 2 : i32
    %c0_i32_19 = arith.constant 0 : i32
    %18 = tpu.memref_slice %arg6[%c2_i32_18, %c0_i32_19] : memref<3x128xf32, #tpu.memory_space<vmem>> -> memref<1x128xf32, #tpu.memory_space<vmem>>
    %c10_i32 = arith.constant 10 : i32
    %c0_i32_20 = arith.constant 0 : i32
    %19 = tpu.memref_slice %arg4[%c10_i32, %c0_i32_20] : memref<12x128xf32, #tpu.memory_space<any>> -> memref<1x128xf32, #tpu.memory_space<any>>
    %20 = tpu.memref_slice %arg8[%c3_i32] : memref<6x!tpu.dma_semaphore, #tpu.memory_space<semaphore_mem>> -> memref<1x!tpu.dma_semaphore, #tpu.memory_space<semaphore_mem>>
    %21 = tpu.memref_squeeze %20 : memref<1x!tpu.dma_semaphore, #tpu.memory_space<semaphore_mem>> -> memref<!tpu.dma_semaphore, #tpu.memory_space<semaphore_mem>>
    tpu.enqueue_dma source(%18 : memref<1x128xf32, #tpu.memory_space<vmem>>) target(%19 : memref<1x128xf32, #tpu.memory_space<any>>) target_semaphore(%21 : memref<!tpu.dma_semaphore, #tpu.memory_space<semaphore_mem>>)
    %c0_i32_21 = arith.constant 0 : i32
    %c1_i32_22 = arith.constant 1 : i32
    %c0_i32_23 = arith.constant 0 : i32
    %22 = tpu.memref_slice %arg2[%c1_i32_22, %c0_i32_23] : memref<8x128xf32, #tpu.memory_space<any>> -> memref<2x128xf32, #tpu.memory_space<any>>
    %c0_i32_24 = arith.constant 0 : i32
    %c0_i32_25 = arith.constant 0 : i32
    %23 = tpu.memref_slice %arg7[%c0_i32_24, %c0_i32_25] : memref<3x128xf32, #tpu.memory_space<vmem>> -> memref<2x128xf32, #tpu.memory_space<vmem>>
    %24 = tpu.memref_slice %arg8[%c0_i32_21] : memref<6x!tpu.dma_semaphore, #tpu.memory_space<semaphore_mem>> -> memref<1x!tpu.dma_semaphore, #tpu.memory_space<semaphore_mem>>
    %25 = tpu.memref_squeeze %24 : memref<1x!tpu.dma_semaphore, #tpu.memory_space<semaphore_mem>> -> memref<!tpu.dma_semaphore, #tpu.memory_space<semaphore_mem>>
    tpu.wait_dma2 semaphore(%25 : memref<!tpu.dma_semaphore, #tpu.memory_space<semaphore_mem>>) src(%22 : memref<2x128xf32, #tpu.memory_space<any>>) dst(%23 : memref<2x128xf32, #tpu.memory_space<vmem>>)
    %c1_i32_26 = arith.constant 1 : i32
    %c7_i32_27 = arith.constant 7 : i32
    %c0_i32_28 = arith.constant 0 : i32
    %26 = tpu.memref_slice %arg2[%c7_i32_27, %c0_i32_28] : memref<8x128xf32, #tpu.memory_space<any>> -> memref<1x128xf32, #tpu.memory_space<any>>
    %c2_i32_29 = arith.constant 2 : i32
    %c0_i32_30 = arith.constant 0 : i32
    %27 = tpu.memref_slice %arg7[%c2_i32_29, %c0_i32_30] : memref<3x128xf32, #tpu.memory_space<vmem>> -> memref<1x128xf32, #tpu.memory_space<vmem>>
    %28 = tpu.memref_slice %arg8[%c1_i32_26] : memref<6x!tpu.dma_semaphore, #tpu.memory_space<semaphore_mem>> -> memref<1x!tpu.dma_semaphore, #tpu.memory_space<semaphore_mem>>
    %29 = tpu.memref_squeeze %28 : memref<1x!tpu.dma_semaphore, #tpu.memory_space<semaphore_mem>> -> memref<!tpu.dma_semaphore, #tpu.memory_space<semaphore_mem>>
    tpu.wait_dma2 semaphore(%29 : memref<!tpu.dma_semaphore, #tpu.memory_space<semaphore_mem>>) src(%26 : memref<1x128xf32, #tpu.memory_space<any>>) dst(%27 : memref<1x128xf32, #tpu.memory_space<vmem>>)
    %c0_31 = arith.constant 0 : index
    %c0_32 = arith.constant 0 : index
    %30 = vector.load %arg7[%c0_31, %c0_32] : memref<3x128xf32, #tpu.memory_space<vmem>>, vector<1x128xf32>
    %c2_33 = arith.constant 2 : index
    %c0_34 = arith.constant 0 : index
    %31 = vector.load %arg3[%c2_33, %c0_34] : memref<3x128xf32, #tpu.memory_space<vmem>>, vector<1x128xf32>
    %32 = arith.addf %30, %31 : vector<1x128xf32>
    %c0_35 = arith.constant 0 : index
    %c0_36 = arith.constant 0 : index
    %33 = vector.load %arg7[%c0_35, %c0_36] : memref<3x128xf32, #tpu.memory_space<vmem>>, vector<1x128xf32>
    tpu.vector_store %arg7[%c0_35, %c0_36], %32 {strides = array<i32>} : memref<3x128xf32, #tpu.memory_space<vmem>>, vector<1x128xf32>,
    %c1_37 = arith.constant 1 : index
    %c0_38 = arith.constant 0 : index
    %34 = vector.load %arg7[%c1_37, %c0_38] : memref<3x128xf32, #tpu.memory_space<vmem>>, vector<1x128xf32>
    %c1_39 = arith.constant 1 : index
    %c0_40 = arith.constant 0 : index
    %35 = vector.load %arg3[%c1_39, %c0_40] : memref<3x128xf32, #tpu.memory_space<vmem>>, vector<1x128xf32>
    %36 = arith.addf %34, %35 : vector<1x128xf32>
    %c1_41 = arith.constant 1 : index
    %c0_42 = arith.constant 0 : index
    %37 = vector.load %arg7[%c1_41, %c0_42] : memref<3x128xf32, #tpu.memory_space<vmem>>, vector<1x128xf32>
    tpu.vector_store %arg7[%c1_41, %c0_42], %36 {strides = array<i32>} : memref<3x128xf32, #tpu.memory_space<vmem>>, vector<1x128xf32>,
    %c2_43 = arith.constant 2 : index
    %c0_44 = arith.constant 0 : index
    %38 = vector.load %arg7[%c2_43, %c0_44] : memref<3x128xf32, #tpu.memory_space<vmem>>, vector<1x128xf32>
    %c0_45 = arith.constant 0 : index
    %c0_46 = arith.constant 0 : index
    %39 = vector.load %arg3[%c0_45, %c0_46] : memref<3x128xf32, #tpu.memory_space<vmem>>, vector<1x128xf32>
    %40 = arith.addf %38, %39 : vector<1x128xf32>
    %c2_47 = arith.constant 2 : index
    %c0_48 = arith.constant 0 : index
    %41 = vector.load %arg7[%c2_47, %c0_48] : memref<3x128xf32, #tpu.memory_space<vmem>>, vector<1x128xf32>
    tpu.vector_store %arg7[%c2_47, %c0_48], %40 {strides = array<i32>} : memref<3x128xf32, #tpu.memory_space<vmem>>, vector<1x128xf32>,
    %c4_i32 = arith.constant 4 : i32
    %c0_i32_49 = arith.constant 0 : i32
    %c0_i32_50 = arith.constant 0 : i32
    %42 = tpu.memref_slice %arg7[%c0_i32_49, %c0_i32_50] : memref<3x128xf32, #tpu.memory_space<vmem>> -> memref<2x128xf32, #tpu.memory_space<vmem>>
    %c1_i32_51 = arith.constant 1 : i32
    %c0_i32_52 = arith.constant 0 : i32
    %43 = tpu.memref_slice %arg5[%c1_i32_51, %c0_i32_52] : memref<8x128xf32, #tpu.memory_space<any>> -> memref<2x128xf32, #tpu.memory_space<any>>
    %44 = tpu.memref_slice %arg8[%c4_i32] : memref<6x!tpu.dma_semaphore, #tpu.memory_space<semaphore_mem>> -> memref<1x!tpu.dma_semaphore, #tpu.memory_space<semaphore_mem>>
    %45 = tpu.memref_squeeze %44 : memref<1x!tpu.dma_semaphore, #tpu.memory_space<semaphore_mem>> -> memref<!tpu.dma_semaphore, #tpu.memory_space<semaphore_mem>>
    tpu.enqueue_dma source(%42 : memref<2x128xf32, #tpu.memory_space<vmem>>) target(%43 : memref<2x128xf32, #tpu.memory_space<any>>) target_semaphore(%45 : memref<!tpu.dma_semaphore, #tpu.memory_space<semaphore_mem>>)
    %c5_i32 = arith.constant 5 : i32
    %c2_i32_53 = arith.constant 2 : i32
    %c0_i32_54 = arith.constant 0 : i32
    %46 = tpu.memref_slice %arg7[%c2_i32_53, %c0_i32_54] : memref<3x128xf32, #tpu.memory_space<vmem>> -> memref<1x128xf32, #tpu.memory_space<vmem>>
    %c7_i32_55 = arith.constant 7 : i32
    %c0_i32_56 = arith.constant 0 : i32
    %47 = tpu.memref_slice %arg5[%c7_i32_55, %c0_i32_56] : memref<8x128xf32, #tpu.memory_space<any>> -> memref<1x128xf32, #tpu.memory_space<any>>
    %48 = tpu.memref_slice %arg8[%c5_i32] : memref<6x!tpu.dma_semaphore, #tpu.memory_space<semaphore_mem>> -> memref<1x!tpu.dma_semaphore, #tpu.memory_space<semaphore_mem>>
    %49 = tpu.memref_squeeze %48 : memref<1x!tpu.dma_semaphore, #tpu.memory_space<semaphore_mem>> -> memref<!tpu.dma_semaphore, #tpu.memory_space<semaphore_mem>>
    tpu.enqueue_dma source(%46 : memref<1x128xf32, #tpu.memory_space<vmem>>) target(%47 : memref<1x128xf32, #tpu.memory_space<any>>) target_semaphore(%49 : memref<!tpu.dma_semaphore, #tpu.memory_space<semaphore_mem>>)
    %c2_i32_57 = arith.constant 2 : i32
    %c0_i32_58 = arith.constant 0 : i32
    %c0_i32_59 = arith.constant 0 : i32
    %50 = tpu.memref_slice %arg6[%c0_i32_58, %c0_i32_59] : memref<3x128xf32, #tpu.memory_space<vmem>> -> memref<2x128xf32, #tpu.memory_space<vmem>>
    %c1_i32_60 = arith.constant 1 : i32
    %c0_i32_61 = arith.constant 0 : i32
    %51 = tpu.memref_slice %arg4[%c1_i32_60, %c0_i32_61] : memref<12x128xf32, #tpu.memory_space<any>> -> memref<2x128xf32, #tpu.memory_space<any>>
    %52 = tpu.memref_slice %arg8[%c2_i32_57] : memref<6x!tpu.dma_semaphore, #tpu.memory_space<semaphore_mem>> -> memref<1x!tpu.dma_semaphore, #tpu.memory_space<semaphore_mem>>
    %53 = tpu.memref_squeeze %52 : memref<1x!tpu.dma_semaphore, #tpu.memory_space<semaphore_mem>> -> memref<!tpu.dma_semaphore, #tpu.memory_space<semaphore_mem>>
    tpu.wait_dma2 semaphore(%53 : memref<!tpu.dma_semaphore, #tpu.memory_space<semaphore_mem>>) src(%50 : memref<2x128xf32, #tpu.memory_space<vmem>>) dst(%51 : memref<2x128xf32, #tpu.memory_space<any>>)
    %c3_i32_62 = arith.constant 3 : i32
    %c2_i32_63 = arith.constant 2 : i32
    %c0_i32_64 = arith.constant 0 : i32
    %54 = tpu.memref_slice %arg6[%c2_i32_63, %c0_i32_64] : memref<3x128xf32, #tpu.memory_space<vmem>> -> memref<1x128xf32, #tpu.memory_space<vmem>>
    %c10_i32_65 = arith.constant 10 : i32
    %c0_i32_66 = arith.constant 0 : i32
    %55 = tpu.memref_slice %arg4[%c10_i32_65, %c0_i32_66] : memref<12x128xf32, #tpu.memory_space<any>> -> memref<1x128xf32, #tpu.memory_space<any>>
    %56 = tpu.memref_slice %arg8[%c3_i32_62] : memref<6x!tpu.dma_semaphore, #tpu.memory_space<semaphore_mem>> -> memref<1x!tpu.dma_semaphore, #tpu.memory_space<semaphore_mem>>
    %57 = tpu.memref_squeeze %56 : memref<1x!tpu.dma_semaphore, #tpu.memory_space<semaphore_mem>> -> memref<!tpu.dma_semaphore, #tpu.memory_space<semaphore_mem>>
    tpu.wait_dma2 semaphore(%57 : memref<!tpu.dma_semaphore, #tpu.memory_space<semaphore_mem>>) src(%54 : memref<1x128xf32, #tpu.memory_space<vmem>>) dst(%55 : memref<1x128xf32, #tpu.memory_space<any>>)
    %c4_i32_67 = arith.constant 4 : i32
    %c0_i32_68 = arith.constant 0 : i32
    %c0_i32_69 = arith.constant 0 : i32
    %58 = tpu.memref_slice %arg7[%c0_i32_68, %c0_i32_69] : memref<3x128xf32, #tpu.memory_space<vmem>> -> memref<2x128xf32, #tpu.memory_space<vmem>>
    %c1_i32_70 = arith.constant 1 : i32
    %c0_i32_71 = arith.constant 0 : i32
    %59 = tpu.memref_slice %arg5[%c1_i32_70, %c0_i32_71] : memref<8x128xf32, #tpu.memory_space<any>> -> memref<2x128xf32, #tpu.memory_space<any>>
    %60 = tpu.memref_slice %arg8[%c4_i32_67] : memref<6x!tpu.dma_semaphore, #tpu.memory_space<semaphore_mem>> -> memref<1x!tpu.dma_semaphore, #tpu.memory_space<semaphore_mem>>
    %61 = tpu.memref_squeeze %60 : memref<1x!tpu.dma_semaphore, #tpu.memory_space<semaphore_mem>> -> memref<!tpu.dma_semaphore, #tpu.memory_space<semaphore_mem>>
    tpu.wait_dma2 semaphore(%61 : memref<!tpu.dma_semaphore, #tpu.memory_space<semaphore_mem>>) src(%58 : memref<2x128xf32, #tpu.memory_space<vmem>>) dst(%59 : memref<2x128xf32, #tpu.memory_space<any>>)
    %c5_i32_72 = arith.constant 5 : i32
    %c2_i32_73 = arith.constant 2 : i32
    %c0_i32_74 = arith.constant 0 : i32
    %62 = tpu.memref_slice %arg7[%c2_i32_73, %c0_i32_74] : memref<3x128xf32, #tpu.memory_space<vmem>> -> memref<1x128xf32, #tpu.memory_space<vmem>>
    %c7_i32_75 = arith.constant 7 : i32
    %c0_i32_76 = arith.constant 0 : i32
    %63 = tpu.memref_slice %arg5[%c7_i32_75, %c0_i32_76] : memref<8x128xf32, #tpu.memory_space<any>> -> memref<1x128xf32, #tpu.memory_space<any>>
    %64 = tpu.memref_slice %arg8[%c5_i32_72] : memref<6x!tpu.dma_semaphore, #tpu.memory_space<semaphore_mem>> -> memref<1x!tpu.dma_semaphore, #tpu.memory_space<semaphore_mem>>
    %65 = tpu.memref_squeeze %64 : memref<1x!tpu.dma_semaphore, #tpu.memory_space<semaphore_mem>> -> memref<!tpu.dma_semaphore, #tpu.memory_space<semaphore_mem>>
    tpu.wait_dma2 semaphore(%65 : memref<!tpu.dma_semaphore, #tpu.memory_space<semaphore_mem>>) src(%62 : memref<1x128xf32, #tpu.memory_space<vmem>>) dst(%63 : memref<1x128xf32, #tpu.memory_space<any>>)
    return
  }
}

</mosaic_0001>

<llo_original>
// kernel: _model_forward_impl.1
$region0: #{_model_forward_impl.1}
  #allocation0 [shape = 'u32[]', space=smem, size = 0x4, offset = 0x4, fixed_abs, tag = 'smem constant byte address 0x4 - core index']
  #allocation1 [shape = 'u32[144,128]{1,0:T(1,128)}', space=vmem, size = 0x12000, scoped, tag = 'internal scratch']
  #allocation2 [shape = 'f32[3,128]{1,0:T(4,128)}', space=vmem, size = 0x800, scoped, tag = 'scratch operand']
  #allocation3 [shape = 'f32[3,128]{1,0:T(4,128)}', space=vmem, size = 0x800, scoped, tag = 'scratch operand']
  #allocation4 [shape = 's32[6]{0}', space=sflag, size = 0x18, scoped, tag = 'scratch operand']
  #allocation5 [shape = 's32[]', space=sflag, size = 0x4, offset = 0, fixed_abs, tag = 'sflag constant byte address 0x0 - dummy sync flag']
  #allocation6 [shape = 's32[]', space=sflag, size = 0x4, offset = 0, fixed_abs, tag = 'sflag constant byte address 0x0 - dummy sync flag']
  #allocation7 [shape = 'u32[]', space=smem, size = 0x4, offset = 0x44, fixed_abs, tag = 'smem constant byte address 0x44 - assertion arg 0']
  #allocation8 [shape = 'u32[]', space=smem, size = 0x4, offset = 0x48, fixed_abs, tag = 'smem constant byte address 0x48 - assertion arg 1']
  #allocation9 [shape = 's32[]', space=sflag, size = 0x4, offset = 0, fixed_abs, tag = 'sflag constant byte address 0x0 - dummy sync flag']
  #allocation10 [shape = 's32[]', space=sflag, size = 0x4, offset = 0, fixed_abs, tag = 'sflag constant byte address 0x0 - dummy sync flag']
  #allocation11 [shape = 's32[]', space=sflag, size = 0x4, offset = 0, fixed_abs, tag = 'sflag constant byte address 0x0 - dummy sync flag']
  #allocation12 [shape = 's32[]', space=sflag, size = 0x4, offset = 0, fixed_abs, tag = 'sflag constant byte address 0x0 - dummy sync flag']
  #allocation13 [shape = 's32[]', space=sflag, size = 0x4, offset = 0, fixed_abs, tag = 'sflag constant byte address 0x0 - dummy sync flag']
  #allocation14 [shape = 's32[]', space=sflag, size = 0x4, offset = 0, fixed_abs, tag = 'sflag constant byte address 0x0 - dummy sync flag']
  #allocation15 [shape = 's32[]', space=sflag, size = 0x4, offset = 0, fixed_abs, tag = 'sflag constant byte address 0x0 - dummy sync flag']
  #allocation16 [shape = 's32[]', space=sflag, size = 0x4, offset = 0, fixed_abs, tag = 'sflag constant byte address 0x0 - dummy sync flag']
  #allocation17 [shape = 's32[]', space=sflag, size = 0x4, offset = 0, fixed_abs, tag = 'sflag constant byte address 0x0 - dummy sync flag']
  #allocation18 [shape = 's32[]', space=sflag, size = 0x4, offset = 0, fixed_abs, tag = 'sflag constant byte address 0x0 - dummy sync flag']
  %s0 = inlined_call_operand.hbm [shape: f32[12,128], index: 0, kind: input, shape index: {}, may-alias: {0,4}]
  %s1 = inlined_call_operand.vmem [shape: f32[2,128], index: 1, kind: input, shape index: {}]
  %s2 = inlined_call_operand.hbm [shape: f32[8,128], index: 2, kind: input, shape index: {}, may-alias: {2,5}]
  %s3 = inlined_call_operand.vmem [shape: f32[3,128], index: 3, kind: input, shape index: {}]
  %s4 = inlined_call_operand.hbm [shape: f32[12,128], index: 4, kind: output, shape index: {0}, may-alias: {0,4}]
  %s5 = inlined_call_operand.hbm [shape: f32[8,128], index: 5, kind: output, shape index: {1}, may-alias: {2,5}]
  %6 = xla_tuple %s4, %s5
  %s7 = sld [smem:[#allocation0]]
  $region34: #{_model_forward_impl.1} parent=0
    _
  %s9 = ssub.s32 1, %s7
  %s10 = scalar_select 0, %s9, %s7
  // Predicated region
  $region2: #{_model_forward_impl.1} parent=0 // pred_check
    _
  $region3: #{_model_forward_impl.1} parent=0 // pred_check_branch
    %12 = sbr.rel (0) target = $region5
  $region4: #{_model_forward_impl.1} parent=0 // pred_region
    _
  $region5: #{_model_forward_impl.1} parent=0 // pred_fallthru
    _
  // Predicated region
  $region6: #{_model_forward_impl.1} parent=0 // pred_check
    _
  $region7: #{_model_forward_impl.1} parent=0 // pred_check_branch
    %14 = sbr.rel (0) target = $region9
  $region8: #{_model_forward_impl.1} parent=0 // pred_region
    _
  $region9: #{_model_forward_impl.1} parent=0 // pred_fallthru
    _
  %s15 = scalar_lea.hbm %s2, 16
  // Predicated region
  $region10: #{_model_forward_impl.1} parent=0 // pred_check
    _
  $region11: #{_model_forward_impl.1} parent=0 // pred_check_branch
    %17 = sbr.rel target = $region13
  $region12: #{_model_forward_impl.1} parent=0 // pred_region
    %18 = sst [smem:[#allocation7]] [#allocation6]
    %19 = sst [smem:[#allocation8]] [#allocation5]
  $region13: #{_model_forward_impl.1} parent=0 // pred_fallthru
    _
  %21 = shalt.err (0)
  %s23 = sshll.u32 [#allocation3], 4
  %s24 = int_to_ptr.vmem [resolvable:$true] %s23
  %26 = dma.hbm_to_vmem [thread:$0]  %s15, 32, %s24, [#allocation4]
  %s27 = scalar_lea.hbm %s2, 112
  %s28 = scalar_lea.vmem [#allocation3], 2
  %s29 = scalar_lea.sflag [#allocation4], 1
  // Predicated region
  $region14: #{_model_forward_impl.1} parent=0 // pred_check
    _
  $region15: #{_model_forward_impl.1} parent=0 // pred_check_branch
    %31 = sbr.rel target = $region17
  $region16: #{_model_forward_impl.1} parent=0 // pred_region
    %32 = sst [smem:[#allocation7]] [#allocation10]
    %33 = sst [smem:[#allocation8]] [#allocation9]
  $region17: #{_model_forward_impl.1} parent=0 // pred_fallthru
    _
  %35 = shalt.err (0)
  %s37 = sshll.u32 %s28, 4
  %s38 = int_to_ptr.vmem [resolvable:$true] %s37
  %40 = dma.hbm_to_vmem [thread:$0]  %s27, 16, %s38, %s29
  %41 = vst [vmem:[#allocation2] sm:$0x1] 45.0
  %v42 = vld [vmem:[%s1 + $0x1] sm:$0x1]
  %43 = vst [vmem:[#allocation2 + $0x1] sm:$0x1] %v42
  %v44 = vld [vmem:[%s1] sm:$0x1]
  %45 = vst [vmem:[#allocation2 + $0x2] sm:$0x1] %v44
  %s46 = scalar_lea.hbm %s4, 16
  %s47 = scalar_lea.sflag [#allocation4], 2
  // Predicated region
  $region18: #{_model_forward_impl.1} parent=0 // pred_check
    _
  $region19: #{_model_forward_impl.1} parent=0 // pred_check_branch
    %49 = sbr.rel target = $region21
  $region20: #{_model_forward_impl.1} parent=0 // pred_region
    %50 = sst [smem:[#allocation7]] [#allocation12]
    %51 = sst [smem:[#allocation8]] [#allocation11]
  $region21: #{_model_forward_impl.1} parent=0 // pred_fallthru
    _
  %53 = shalt.err (0)
  %s55 = sshll.u32 [#allocation2], 4
  %s56 = int_to_ptr.vmem [resolvable:$true] %s55
  %58 = dma.vmem_to_hbm [thread:$0]  %s56, 32, %s46, %s47
  %s59 = scalar_lea.vmem [#allocation2], 2
  %s60 = scalar_lea.hbm %s4, 160
  %s61 = scalar_lea.sflag [#allocation4], 3
  // Predicated region
  $region22: #{_model_forward_impl.1} parent=0 // pred_check
    _
  $region23: #{_model_forward_impl.1} parent=0 // pred_check_branch
    %63 = sbr.rel target = $region25
  $region24: #{_model_forward_impl.1} parent=0 // pred_region
    %64 = sst [smem:[#allocation7]] [#allocation14]
    %65 = sst [smem:[#allocation8]] [#allocation13]
  $region25: #{_model_forward_impl.1} parent=0 // pred_fallthru
    _
  %67 = shalt.err (0)
  %s69 = sshll.u32 %s59, 4
  %s70 = int_to_ptr.vmem [resolvable:$true] %s69
  %72 = dma.vmem_to_hbm [thread:$0]  %s70, 16, %s60, %s61
  %s73 = smul.u32 2, 1
  %s74 = sshll.u32 %s73, 4
  %75 = dma.done [#allocation4], %s74
  %s76 = smul.u32 1, 1
  %s77 = sshll.u32 %s76, 4
  %78 = dma.done %s29, %s77
  %v79 = vld [vmem:[#allocation3] sm:$0x1]
  %v80 = vld [vmem:[%s3 + $0x2] sm:$0x1]
  %v81 = vadd.f32 %v79, %v80
  %82 = vst [vmem:[#allocation3] sm:$0x1] %v81
  %v83 = vld [vmem:[#allocation3 + $0x1] sm:$0x1]
  %v84 = vld [vmem:[%s3 + $0x1] sm:$0x1]
  %v85 = vadd.f32 %v83, %v84
  %86 = vst [vmem:[#allocation3 + $0x1] sm:$0x1] %v85
  %v87 = vld [vmem:[#allocation3 + $0x2] sm:$0x1]
  %v88 = vld [vmem:[%s3] sm:$0x1]
  %v89 = vadd.f32 %v87, %v88
  %90 = vst [vmem:[#allocation3 + $0x2] sm:$0x1] %v89
  %s91 = scalar_lea.hbm %s5, 16
  %s92 = scalar_lea.sflag [#allocation4], 4
  // Predicated region
  $region26: #{_model_forward_impl.1} parent=0 // pred_check
    _
  $region27: #{_model_forward_impl.1} parent=0 // pred_check_branch
    %94 = sbr.rel target = $region29
  $region28: #{_model_forward_impl.1} parent=0 // pred_region
    %95 = sst [smem:[#allocation7]] [#allocation16]
    %96 = sst [smem:[#allocation8]] [#allocation15]
  $region29: #{_model_forward_impl.1} parent=0 // pred_fallthru
    _
  %98 = shalt.err (0)
  %s100 = sshll.u32 [#allocation3], 4
  %s101 = int_to_ptr.vmem [resolvable:$true] %s100
  %103 = dma.vmem_to_hbm [thread:$0]  %s101, 32, %s91, %s92
  %s104 = scalar_lea.hbm %s5, 112
  %s105 = scalar_lea.sflag [#allocation4], 5
  // Predicated region
  $region30: #{_model_forward_impl.1} parent=0 // pred_check
    _
  $region31: #{_model_forward_impl.1} parent=0 // pred_check_branch
    %107 = sbr.rel target = $region33
  $region32: #{_model_forward_impl.1} parent=0 // pred_region
    %108 = sst [smem:[#allocation7]] [#allocation18]
    %109 = sst [smem:[#allocation8]] [#allocation17]
  $region33: #{_model_forward_impl.1} parent=0 // pred_fallthru
    _
  %111 = shalt.err (0)
  %s113 = sshll.u32 %s28, 4
  %s114 = int_to_ptr.vmem [resolvable:$true] %s113
  %116 = dma.vmem_to_hbm [thread:$0]  %s114, 16, %s104, %s105
  %s117 = sshll.u32 %s73, 4
  %118 = dma.done %s47, %s117
  %s119 = sshll.u32 %s76, 4
  %120 = dma.done %s61, %s119
  %s121 = sshll.u32 %s73, 4
  %122 = dma.done %s92, %s121
  %s123 = sshll.u32 %s76, 4
  %124 = dma.done %s105, %s123
  %125 = vsyncmov [#allocation4]
  %s126 = vpop.sfrf %125
  %p127 = scmp.eq.s32.totalorder %s126, 0
  %p128 = pneg %p127
  %130 = shalt.err (%p128)
  %s131 = scalar_lea.sflag [#allocation4], 1
  %132 = vsyncmov %s131
  %s133 = vpop.sfrf %132
  %p134 = scmp.eq.s32.totalorder %s133, 0
  %p135 = pneg %p134
  %137 = shalt.err (%p135)
  %s138 = scalar_lea.sflag [#allocation4], 2
  %139 = vsyncmov %s138
  %s140 = vpop.sfrf %139
  %p141 = scmp.eq.s32.totalorder %s140, 0
  %p142 = pneg %p141
  %144 = shalt.err (%p142)
  %s145 = scalar_lea.sflag [#allocation4], 3
  %146 = vsyncmov %s145
  %s147 = vpop.sfrf %146
  %p148 = scmp.eq.s32.totalorder %s147, 0
  %p149 = pneg %p148
  %151 = shalt.err (%p149)
  %s152 = scalar_lea.sflag [#allocation4], 4
  %153 = vsyncmov %s152
  %s154 = vpop.sfrf %153
  %p155 = scmp.eq.s32.totalorder %s154, 0
  %p156 = pneg %p155
  %158 = shalt.err (%p156)
  %s159 = scalar_lea.sflag [#allocation4], 5
  %160 = vsyncmov %s159
  %s161 = vpop.sfrf %160
  %p162 = scmp.eq.s32.totalorder %s161, 0
  %p163 = pneg %p162
  %165 = shalt.err (%p163)

</llo_original>
